<compile_context>
chip_gen: v6e
topology: v6e:2x2x1
jax: 0.10.0
libtpu: 0.0.40
codegen_flags: <defaults>
</compile_context>

<pallas_src>
import jax
import jax.numpy as jnp
from jax.experimental import pallas as pl
from jax.experimental.pallas import tpu as pltpu


def _choose_block_rows(bc, hw, itemsize, budget_bytes=2 * 1024 * 1024):
    """Largest row-tile along the fused B*C axis that divides bc, satisfies the
    sublane constraint (multiple of 8 or equal to bc) and stays under the VMEM
    budget (double-buffer friendly on every TPU generation)."""
    if bc * hw * itemsize <= budget_bytes:
        return bc
    divs = [d for d in range(8, bc, 8) if bc % d == 0]
    fitting = [d for d in divs if d * hw * itemsize <= budget_bytes]
    if fitting:
        return max(fitting)
    if divs:
        return min(divs)
    return bc  # fallback: single block


def _make_tv_kernel(height, width):
    hw = height * width

    def kernel(x_ref, out_ref):
        # x_ref: (TBC, H*W) block, each row is one flattened (H, W) image.
        x = x_ref[...]

        # Height direction: vertical neighbours are exactly `width` apart in
        # the flattened index; every such pair is valid -> no mask needed.
        if height > 1:
            dh = (x[:, width:] - x[:, : hw - width]).astype(jnp.float32)
            h_part = jnp.sum(jnp.abs(dh))
        else:
            h_part = jnp.float32(0.0)

        # Width direction: horizontal neighbours are adjacent in the flattened
        # index; mask out pairs that straddle an image-row boundary.
        if width > 1:
            dw = (x[:, 1:] - x[:, : hw - 1]).astype(jnp.float32)
            col = jax.lax.broadcasted_iota(jnp.int32, dw.shape, 1)
            w_part = jnp.sum(
                jnp.where(col % width != width - 1, jnp.abs(dw), 0.0))
        else:
            w_part = jnp.float32(0.0)

        # Lane-dense (1, 8, 128) partial-sum tile: sublane 0 carries the
        # height partial, sublane 1 the width partial.  One tile per grid
        # step -> safe with a "parallel" grid axis (no resident accumulator).
        row = jax.lax.broadcasted_iota(jnp.int32, (1, 8, 128), 1)
        out_ref[...] = jnp.where(
            row == 0, h_part, jnp.where(row == 1, w_part, jnp.float32(0.0)))

    return kernel


def tvl1_loss(x, tvloss_weight=1.0):
    """x: (B, C, H, W) float array. Returns scalar TV-L1 loss (float32)."""
    b, c, height, width = x.shape
    bc = b * c
    hw = height * width
    x_flat = x.reshape(bc, hw)  # lane-dense layout, metadata-only reshape

    tbc = _choose_block_rows(bc, hw, x.dtype.itemsize)
    nb = bc // tbc  # tbc divides bc by construction

    partials = pl.pallas_call(
        _make_tv_kernel(height, width),
        out_shape=jax.ShapeDtypeStruct((nb, 8, 128), jnp.float32),
        grid_spec=pltpu.PrefetchScalarGridSpec(
            num_scalar_prefetch=0,
            grid=(nb,),
            in_specs=[pl.BlockSpec((tbc, hw), lambda i: (i, 0))],
            out_specs=pl.BlockSpec((1, 8, 128), lambda i: (i, 0, 0)),
        ),
        compiler_params=pltpu.CompilerParams(
            dimension_semantics=("parallel",),
            vmem_limit_bytes=32 * 1024 * 1024,
        ),
    )(x_flat)

    h_tv = jnp.sum(partials[:, 0, 0])
    w_tv = jnp.sum(partials[:, 1, 0])

    count_h = c * (height - 1) * width
    count_w = c * height * (width - 1)
    return tvloss_weight * (h_tv / count_h + w_tv / count_w) / b


def tvl1_ref(x, tvloss_weight=1.0):
    b, c, h, w = x.shape
    count_h = c * (h - 1) * w
    count_w = c * h * (w - 1)
    h_tv = jnp.sum(jnp.abs(x[..., 1:, :] - x[..., : h - 1, :]))
    w_tv = jnp.sum(jnp.abs(x[..., :, 1:] - x[..., :, : w - 1]))
    return tvloss_weight * (h_tv / count_h + w_tv / count_w) / b


if __name__ == "__main__":
    key = jax.random.PRNGKey(0)
    x = jax.random.normal(key, (2, 4, 16, 16), dtype=jnp.float32)

    out = jax.block_until_ready(tvl1_loss(x, tvloss_weight=1.0))
    ref = tvl1_ref(x, tvloss_weight=1.0)

    assert jnp.allclose(out, ref, rtol=1e-5, atol=1e-5), (out, ref)
    print("KERNEL_OK")
</pallas_src>

<mosaic_0001>
module attributes {stable_mosaic.version = 11 : i64} {
  func.func @kernel(%arg0: i32, %arg1: memref<8x256xf32, #tpu.memory_space<vmem>>, %arg2: memref<1x8x128xf32, #tpu.memory_space<vmem>>) attributes {dimension_semantics = [#tpu.dimension_semantics<parallel>], iteration_bounds = array<i64: 1>, scalar_prefetch = 0 : i64, scratch_operands = 0 : i64, tpu.core_type = #tpu.core_type<tc>, window_params = [{transform_indices = @transform_0, window_bounds = array<i64: 8, 256>}, {transform_indices = @transform_1, window_bounds = array<i64: 1, 8, 128>}]} {
    %c0 = arith.constant 0 : index
    %c0_0 = arith.constant 0 : index
    %0 = vector.load %arg1[%c0, %c0_0] : memref<8x256xf32, #tpu.memory_space<vmem>>, vector<8x256xf32>
    %1 = vector.extract_strided_slice %0 {offsets = [0, 16], sizes = [8, 240], strides = [1, 1]} : vector<8x256xf32> to vector<8x240xf32>
    %2 = vector.extract_strided_slice %0 {offsets = [0, 0], sizes = [8, 240], strides = [1, 1]} : vector<8x256xf32> to vector<8x240xf32>
    %3 = arith.subf %1, %2 : vector<8x240xf32>
    %4 = math.absf %3 : vector<8x240xf32>
    %5 = vector.shape_cast %4 : vector<8x240xf32> to vector<1x8x240xf32>
    %cst = arith.constant dense<0.000000e+00> : vector<1xf32>
    %6 = vector.multi_reduction <add>, %5, %cst [1, 2] : vector<1x8x240xf32> to vector<1xf32>
    %7 = vector.shape_cast %6 : vector<1xf32> to vector<1x1x1xf32>
    %8 = vector.extract %7[0, 0, 0] : f32 from vector<1x1x1xf32>
    %9 = vector.extract_strided_slice %0 {offsets = [0, 1], sizes = [8, 255], strides = [1, 1]} : vector<8x256xf32> to vector<8x255xf32>
    %10 = vector.extract_strided_slice %0 {offsets = [0, 0], sizes = [8, 255], strides = [1, 1]} : vector<8x256xf32> to vector<8x255xf32>
    %11 = arith.subf %9, %10 : vector<8x255xf32>
    %12 = tpu.iota {dimensions = array<i32: 1>} : vector<8x255xi32>
    %c16_i32 = arith.constant 16 : i32
    %c0_i32 = arith.constant 0 : i32
    %13 = arith.cmpi eq, %c16_i32, %c0_i32 : i32
    %c1_i32 = arith.constant 1 : i32
    %14 = arith.select %13, %c1_i32, %c16_i32 : i32
    %15 = vector.broadcast %14 : i32 to vector<8x255xi32>
    %16 = arith.remsi %12, %15 : vector<8x255xi32>
    %c0_i32_1 = arith.constant 0 : i32
    %17 = vector.broadcast %c0_i32_1 : i32 to vector<8x255xi32>
    %18 = arith.cmpi ne, %16, %17 : vector<8x255xi32>
    %c0_i32_2 = arith.constant 0 : i32
    %19 = vector.broadcast %c0_i32_2 : i32 to vector<8x255xi32>
    %20 = arith.cmpi slt, %16, %19 : vector<8x255xi32>
    %c0_i32_3 = arith.constant 0 : i32
    %21 = arith.cmpi slt, %14, %c0_i32_3 : i32
    %22 = vector.broadcast %21 : i1 to vector<8x255xi1>
    %23 = vector.broadcast %22 : vector<8x255xi1> to vector<8x255xi1>
    %24 = arith.xori %20, %23 : vector<8x255xi1>
    %25 = arith.andi %24, %18 : vector<8x255xi1>
    %26 = vector.broadcast %14 : i32 to vector<8x255xi32>
    %27 = arith.addi %16, %26 : vector<8x255xi32>
    %28 = arith.select %25, %27, %16 : vector<8x255xi1>, vector<8x255xi32>
    %c15_i32 = arith.constant 15 : i32
    %29 = vector.broadcast %c15_i32 : i32 to vector<8x255xi32>
    %30 = arith.cmpi ne, %28, %29 : vector<8x255xi32>
    %31 = math.absf %11 : vector<8x255xf32>
    %cst_4 = arith.constant 0.000000e+00 : f32
    %32 = vector.broadcast %cst_4 : f32 to vector<8x255xf32>
    %33 = arith.select %30, %31, %32 : vector<8x255xi1>, vector<8x255xf32>
    %34 = vector.shape_cast %33 : vector<8x255xf32> to vector<1x8x255xf32>
    %cst_5 = arith.constant dense<0.000000e+00> : vector<1xf32>
    %35 = vector.multi_reduction <add>, %34, %cst_5 [1, 2] : vector<1x8x255xf32> to vector<1xf32>
    %36 = vector.shape_cast %35 : vector<1xf32> to vector<1x1x1xf32>
    %37 = vector.extract %36[0, 0, 0] : f32 from vector<1x1x1xf32>
    %38 = tpu.iota {dimensions = array<i32: 1>} : vector<1x8x128xi32>
    %c0_i32_6 = arith.constant 0 : i32
    %39 = vector.broadcast %c0_i32_6 : i32 to vector<1x8x128xi32>
    %40 = arith.cmpi eq, %38, %39 : vector<1x8x128xi32>
    %c1_i32_7 = arith.constant 1 : i32
    %41 = vector.broadcast %c1_i32_7 : i32 to vector<1x8x128xi32>
    %42 = arith.cmpi eq, %38, %41 : vector<1x8x128xi32>
    %cst_8 = arith.constant 0.000000e+00 : f32
    %43 = vector.broadcast %37 : f32 to vector<1x8x128xf32>
    %44 = vector.broadcast %cst_8 : f32 to vector<1x8x128xf32>
    %45 = arith.select %42, %43, %44 : vector<1x8x128xi1>, vector<1x8x128xf32>
    %46 = vector.broadcast %8 : f32 to vector<1x8x128xf32>
    %47 = arith.select %40, %46, %45 : vector<1x8x128xi1>, vector<1x8x128xf32>
    %c0_9 = arith.constant 0 : index
    %c0_10 = arith.constant 0 : index
    %c0_11 = arith.constant 0 : index
    %48 = vector.load %arg2[%c0_9, %c0_10, %c0_11] : memref<1x8x128xf32, #tpu.memory_space<vmem>>, vector<1x8x128xf32>
    tpu.vector_store %arg2[%c0_9, %c0_10, %c0_11], %47 {strides = array<i32>} : memref<1x8x128xf32, #tpu.memory_space<vmem>>, vector<1x8x128xf32>,
    return
  }
  func.func @transform_0(%arg0: i32) -> (i32, i32) {
    %c0_i32 = arith.constant 0 : i32
    %c0_i32_0 = arith.constant 0 : i32
    return %arg0, %c0_i32 : i32, i32
  }
  func.func @transform_1(%arg0: i32) -> (i32, i32, i32) {
    %c0_i32 = arith.constant 0 : i32
    %c0_i32_0 = arith.constant 0 : i32
    %c0_i32_1 = arith.constant 0 : i32
    return %arg0, %c0_i32, %c0_i32_0 : i32, i32, i32
  }
}

</mosaic_0001>

<llo_original>
// kernel: tpu_custom_call.1
$region0: #{tpu_custom_call.1}
  #allocation0 [shape = 'u32[]', space=smem, size = 0x4, offset = 0x4, fixed_abs, tag = 'smem constant byte address 0x4 - core index']
  #allocation1 [shape = 'u32[144,128]{1,0:T(1,128)}', space=vmem, size = 0x12000, scoped, tag = 'internal scratch']
  %s0 = inlined_call_operand.hbm [shape: f32[8,256], index: 0, kind: input, shape index: {}]
  %s1 = inlined_call_operand.hbm [shape: f32[1,8,128], index: 1, kind: output, shape index: {}]
  %s2 = sld [smem:[#allocation0]]
  $region18: #{tpu_custom_call.1} parent=0
    _
  %s4 = ssub.s32 1, %s2
  %s5 = scalar_select 0, %s4, %s2
  $region1: #{tpu_custom_call.1} parent=0
    #allocation2 [shape = 'u8[8192]{0}', space=vmem, size = 0x2000, scoped, tag = 'input window, operand 0, single buffered']
    #allocation3 [shape = 's32[1]{0}', space=sflag, size = 0x4, scoped, tag = 'scoped memory for tpu_custom_call.1']
    #allocation4 [shape = 's32[1]{0}', space=sflag, size = 0x4, scoped, tag = 'scoped memory for tpu_custom_call.1']
    #allocation5 [shape = 'u8[4096]{0}', space=vmem, size = 0x1000, scoped, tag = 'output window, operand 0, single buffered']
    %6 = vsyncpa [#allocation3], 0
    %7 = vsyncpa [#allocation4], 0
    // Predicated region
    $region2: #{tpu_custom_call.1} parent=1 // pred_check
      _
    $region3: #{tpu_custom_call.1} parent=1 // pred_check_branch
      %9 = sbr.rel (0) target = $region5
    $region4: #{tpu_custom_call.1} parent=1 // pred_region
      %s11 = ssub.s32 256, 256
      %12 = vsyncadd [#allocation3], %s11
      %s14 = sshll.u32 [#allocation2], 4
      %s15 = int_to_ptr.vmem [resolvable:$true] %s14
      %17 = dma.hbm_to_vmem [thread:$0]  %s0, 256, %s15, [#allocation3]
    $region5: #{tpu_custom_call.1} parent=1 // pred_fallthru
      _
    // Predicated region
    $region6: #{tpu_custom_call.1} parent=1 // pred_check
      _
    $region7: #{tpu_custom_call.1} parent=1 // pred_check_branch
      %19 = sbr.rel (0) target = $region9
    $region8: #{tpu_custom_call.1} parent=1 // pred_region
      %20 = dma.done [#allocation3], 256
    $region9: #{tpu_custom_call.1} parent=1 // pred_fallthru
      _
    %v21 = vld [vmem:[#allocation2] sm:$0xff]
    %v22 = vld [vmem:[#allocation2 + $0x8] sm:$0xff]
    %25 = vrot.lane.b32.xlu0 %v21, 16
    %v26 = vpop.permute.xlu0 %25
    %27 = vrot.lane.b32.xlu0 %v22, 16
    %v28 = vpop.permute.xlu0 %27
    %vm29 = vcmask 130048
    %v30 = vsel %vm29, %v26, %v28
    %v33 = vsub.f32 %v21, %v26
    %v34 = vsub.f32 %v22, %v30
    %v35 = vand.u32 2147483647, %v33
    %v36 = vand.u32 2147483647, %v34
    %39 = vrot.lane.b32.xlu0 %v35, 112
    %v40 = vpop.permute.xlu0 %39
    %41 = vrot.lane.b32.xlu0 %v36, 112
    %v42 = vpop.permute.xlu0 %41
    %vm43 = vcmask 916480
    %v44 = vsel %vm43, %v40, %v42
    %v47 = vsel %vm43, %v42, 0.0
    %v48 = vadd.f32 %v44, %v47
    %49 = vadd.xlane.f32.xlu0 %v48
    %v50 = vpop.xlane.xlu0 %49
    %v51 = vrot.slane %v50, 4
    %v52 = vadd.f32 %v50, %v51
    %v53 = vrot.slane %v52, 2
    %v54 = vadd.f32 %v52, %v53
    %v55 = vrot.slane %v54, 1
    %v56 = vadd.f32 %v54, %v55
    %s57 = vtos %v56
    %58 = vrot.lane.b32.xlu0 %v21, 1
    %v59 = vpop.permute.xlu0 %58
    %60 = vrot.lane.b32.xlu0 %v22, 1
    %v61 = vpop.permute.xlu0 %60
    %vm62 = vcmask 7168
    %v63 = vsel %vm62, %v59, %v61
    %v66 = vsub.f32 %v21, %v59
    %v67 = vsub.f32 %v22, %v63
    %v68 = vlaneseq
    %v69 = vand.u32 %v68, 127
    %v70 = vadd.s32 %v69, 128
    %vm71 = vcmp.lt.s32.totalorder %v69, 0
    %v72 = vsub.s32 0, %v69
    %v73 = vsel %vm71, %v72, %v69
    %v74 = vshrl.u32 %v73, 4
    %v75 = vand.u32 %v73, 15
    %v76 = vsub.s32 0, %v75
    %v77 = vsel %vm71, %v76, %v75
    %vm78 = vcmp.lt.s32.totalorder %v70, 0
    %v79 = vsub.s32 0, %v70
    %v80 = vsel %vm78, %v79, %v70
    %v81 = vshrl.u32 %v80, 4
    %v82 = vand.u32 %v80, 15
    %v83 = vsub.s32 0, %v82
    %v84 = vsel %vm78, %v83, %v82
    %vm85 = vcmp.ne.s32.totalorder %v77, 0
    %vm86 = vcmp.ne.s32.totalorder %v84, 0
    %vm87 = vcmp.lt.s32.totalorder %v77, 0
    %vm88 = vcmp.lt.s32.totalorder %v84, 0
    %vm89 = vmand %vm87, %vm85
    %vm90 = vmand %vm88, %vm86
    %v91 = vadd.s32 %v77, 16
    %v92 = vadd.s32 %v84, 16
    %v93 = vsel %vm89, %v91, %v77
    %v94 = vsel %vm90, %v92, %v84
    %vm95 = vcmp.ne.s32.totalorder %v93, 15
    %vm96 = vcmp.ne.s32.totalorder %v94, 15
    %v97 = vand.u32 2147483647, %v66
    %v98 = vand.u32 2147483647, %v67
    %101 = vrot.lane.b32.xlu0 %v97, 127
    %v102 = vpop.permute.xlu0 %101
    %103 = vrot.lane.b32.xlu0 %v98, 127
    %v104 = vpop.permute.xlu0 %103
    %vm105 = vcmask 1039360
    %v106 = vsel %vm105, %v102, %v104
    %v109 = vsel %vm95, %v106, 0.0
    %v110 = vsel %vm96, %v104, 0.0
    %v111 = vsel %vm105, %v110, 0.0
    %v112 = vadd.f32 %v109, %v111
    %113 = vadd.xlane.f32.xlu0 %v112
    %v114 = vpop.xlane.xlu0 %113
    %v115 = vrot.slane %v114, 4
    %v116 = vadd.f32 %v114, %v115
    %v117 = vrot.slane %v116, 2
    %v118 = vadd.f32 %v116, %v117
    %v119 = vrot.slane %v118, 1
    %v120 = vadd.f32 %v118, %v119
    %s121 = vtos %v120
    %v122 = vlaneseq
    %v123 = vshrl.u32 %v122, 7
    %vm124 = vcmp.eq.s32.totalorder %v123, 0
    %vm125 = vcmp.eq.s32.totalorder %v123, 1
    %v126 = vstv %s121
    %v127 = vsel %vm125, %v126, 0.0
    %v128 = vstv %s57
    %v129 = vsel %vm124, %v128, %v127
    %130 = vst [vmem:[#allocation5] sm:$0xff] %v129
    // Predicated region
    $region10: #{tpu_custom_call.1} parent=1 // pred_check
      _
    $region11: #{tpu_custom_call.1} parent=1 // pred_check_branch
      %132 = sbr.rel (0) target = $region13
    $region12: #{tpu_custom_call.1} parent=1 // pred_region
      %s134 = ssub.s32 128, 128
      %135 = vsyncadd [#allocation4], %s134
      %s137 = sshll.u32 [#allocation5], 4
      %s138 = int_to_ptr.vmem [resolvable:$true] %s137
      %140 = dma.vmem_to_hbm [thread:$0]  %s138, 128, %s1, [#allocation4]
    $region13: #{tpu_custom_call.1} parent=1 // pred_fallthru
      _
    // Predicated region
    $region14: #{tpu_custom_call.1} parent=1 // pred_check
      _
    $region15: #{tpu_custom_call.1} parent=1 // pred_check_branch
      %142 = sbr.rel (0) target = $region17
    $region16: #{tpu_custom_call.1} parent=1 // pred_region
      %143 = dma.done [#allocation4], 128
    $region17: #{tpu_custom_call.1} parent=1 // pred_fallthru
      _
    %144 = vsyncpa [#allocation3], 1
    %145 = vsyncpa [#allocation4], 1

</llo_original>
